<compile_context>
chip_gen: v6e
topology: v6e:2x2x1
jax: 0.10.0
libtpu: 0.0.40
codegen_flags: <defaults>
</compile_context>

<pallas_src>
import math
from functools import partial

import jax
import jax.numpy as jnp
from jax.experimental import pallas as pl
from jax.experimental.pallas import tpu as pltpu

_INV_SQRT2 = 1.0 / math.sqrt(2.0)


def _round_up(v, m):
    return ((v + m - 1) // m) * m


def _gelu_exact(x):
    # torch.nn.functional.gelu default = exact (erf) variant
    return 0.5 * x * (1.0 + jax.lax.erf(x * _INV_SQRT2))


def fff_kernel(x_ref, w1t_ref, w2_ref, out_ref, *, depth):
    w1t = w1t_ref[...]                          # (D_in, n_nodes_pad)
    w2 = w2_ref[...]                            # (n_nodes_pad, out_pad)
    x = x_ref[...].astype(w1t.dtype)            # (TM, D_in)  (no-op cast in f32 mode)

    tm = x.shape[0]
    n_nodes_pad = w1t.shape[1]

    # Scores of x against every node's hyperplane: (TM, n_nodes_pad), f32 accum.
    scores = jnp.dot(x, w1t, preferred_element_type=jnp.float32)

    node_iota = jax.lax.broadcasted_iota(jnp.int32, (tm, n_nodes_pad), 1)
    current = jnp.zeros((tm, 1), dtype=jnp.int32)
    path_mask = jnp.zeros((tm, n_nodes_pad), dtype=jnp.float32)

    # Tree walk (static, depth+1 levels): only accumulate the 0/1 path mask.
    # NOTE: the walk is O((depth+1) * n_nodes) elementwise work; for realistic
    # FFF sizes both matmuls dominate, so full-width one-hots are fine here.
    for _ in range(depth + 1):
        onehot = (node_iota == current).astype(jnp.float32)          # (TM, n_nodes_pad)
        score_i = jnp.sum(scores * onehot, axis=-1, keepdims=True)   # (TM, 1)
        path_mask = path_mask + onehot
        current = current * 2 + (score_i >= 0.0).astype(jnp.int32) + 1

    # Sparse coefficients: gelu(score) on path nodes (one EUP pass), else 0.
    coeff = (_gelu_exact(scores) * path_mask).astype(w2.dtype)

    out_ref[...] = jnp.dot(coeff, w2, preferred_element_type=jnp.float32)


def prepare_fff_weights(w1s, w2s, depth, param_dtype=jnp.float32):
    """One-time weight prep: transpose + pad node axis to 2^(depth+1) and the
    output axis to a multiple of 128.  The padded node is never reachable by
    the tree walk and its w2 row is zero, so results are unchanged."""
    n_nodes, input_width = w1s.shape
    output_width = w2s.shape[1]
    n_nodes_pad = 2 ** (depth + 1)
    out_pad = _round_up(output_width, 128)

    w1t_pad = jnp.zeros((input_width, n_nodes_pad), param_dtype)
    w1t_pad = w1t_pad.at[:, :n_nodes].set(jnp.transpose(w1s).astype(param_dtype))
    w2_pad = jnp.zeros((n_nodes_pad, out_pad), param_dtype)
    w2_pad = w2_pad.at[:n_nodes, :output_width].set(w2s.astype(param_dtype))
    return w1t_pad, w2_pad


def fff_forward(x, w1t_pad, w2_pad, depth, output_width, *, block_m=512,
                vmem_cap_bytes=48 * 1024 * 1024):
    """x: (B, input_width); weights from prepare_fff_weights.
    Returns (B, 1, output_width) to match the torch bmm output."""
    B, input_width = x.shape
    n_nodes_pad = w1t_pad.shape[1]
    out_pad = w2_pad.shape[1]
    w_item = jnp.dtype(w1t_pad.dtype).itemsize
    x_item = jnp.dtype(x.dtype).itemsize

    def vmem_estimate(tm):
        xb = 2 * tm * input_width * x_item                      # x tile, double-buffered
        ob = 2 * tm * out_pad * 4                               # out tile, double-buffered
        wb = 2 * (input_width * n_nodes_pad + n_nodes_pad * out_pad) * w_item
        tmp = 4 * tm * n_nodes_pad * 4                          # scores/onehot/mask/coeff
        return xb + ob + wb + tmp

    # Batch tile: multiple of 8, big enough to feed the MXU, small enough for
    # a generation-portable VMEM budget (v7x has 64 MiB physical VMEM).
    tm = max(8, min(_round_up(B, 8), block_m))
    while tm > 8 and vmem_estimate(tm) > vmem_cap_bytes:
        tm = max(8, (tm // 2 // 8) * 8)

    b_pad = _round_up(B, tm)
    if b_pad != B:
        x = jnp.pad(x, ((0, b_pad - B), (0, 0)))

    vmem_limit = int(min(vmem_cap_bytes,
                         max(32 * 1024 * 1024, vmem_estimate(tm) + (2 << 20))))

    out = pl.pallas_call(
        partial(fff_kernel, depth=depth),
        out_shape=jax.ShapeDtypeStruct((b_pad, out_pad), jnp.float32),
        grid_spec=pltpu.PrefetchScalarGridSpec(
            num_scalar_prefetch=0,
            grid=(b_pad // tm,),
            in_specs=[
                pl.BlockSpec((tm, input_width), lambda i: (i, 0)),
                pl.BlockSpec((input_width, n_nodes_pad), lambda i: (0, 0)),
                pl.BlockSpec((n_nodes_pad, out_pad), lambda i: (0, 0)),
            ],
            out_specs=pl.BlockSpec((tm, out_pad), lambda i: (i, 0)),
        ),
        compiler_params=pltpu.CompilerParams(
            dimension_semantics=("parallel",),
            vmem_limit_bytes=vmem_limit,
        ),
    )(x, w1t_pad, w2_pad)

    return out[:B, :output_width][:, None, :]


def fff_reference(x, w1s, w2s, depth):
    """Pure-JAX replica of the PyTorch forward for verification."""
    B = x.shape[0]
    current = jnp.zeros((B,), dtype=jnp.int32)
    all_nodes, all_logits = [], []
    for _ in range(depth + 1):
        all_nodes.append(current)
        plane = w1s[current]                       # (B, D_in)
        score = jnp.sum(x * plane, axis=-1)        # (B,)
        all_logits.append(score)
        current = current * 2 + (score >= 0).astype(jnp.int32) + 1
    nodes = jnp.stack(all_nodes, axis=1)           # (B, depth+1)
    logits = jnp.stack(all_logits, axis=1)         # (B, depth+1)
    sel_w2 = w2s[nodes.reshape(-1)].reshape(B, depth + 1, -1)
    mlp1 = 0.5 * logits * (1.0 + jax.lax.erf(logits * _INV_SQRT2))
    return jnp.einsum("bd,bdo->bo", mlp1, sel_w2)[:, None, :]


if __name__ == "__main__":
    input_width = 32
    depth = 3
    output_width = 16
    batch = 8
    n_nodes = 2 ** (depth + 1) - 1  # 15

    key = jax.random.PRNGKey(0)
    kx, kw1, kw2 = jax.random.split(key, 3)

    init_l1 = 1.0 / math.sqrt(input_width)
    init_l2 = 1.0 / math.sqrt(depth + 1)
    w1s = jax.random.uniform(kw1, (n_nodes, input_width), jnp.float32,
                             minval=-init_l1, maxval=init_l1)
    w2s = jax.random.uniform(kw2, (n_nodes, output_width), jnp.float32,
                             minval=-init_l2, maxval=init_l2)
    x = jax.random.normal(kx, (batch, input_width), jnp.float32)

    # Weights are prepared once (transpose + padding), not per forward call.
    w1t_pad, w2_pad = prepare_fff_weights(w1s, w2s, depth, param_dtype=jnp.float32)

    out = fff_forward(x, w1t_pad, w2_pad, depth, output_width)
    out = jax.block_until_ready(out)

    ref = fff_reference(x, w1s, w2s, depth)
    assert out.shape == (batch, 1, output_width), out.shape
    assert jnp.allclose(out, ref, atol=1e-5, rtol=1e-5), "mismatch vs reference"

    print("KERNEL_OK")
</pallas_src>

<mosaic_0001>
module attributes {stable_mosaic.version = 11 : i64} {
  func.func @fff_kernel(%arg0: i32, %arg1: memref<8x32xf32, #tpu.memory_space<vmem>>, %arg2: memref<32x16xf32, #tpu.memory_space<vmem>>, %arg3: memref<16x128xf32, #tpu.memory_space<vmem>>, %arg4: memref<8x128xf32, #tpu.memory_space<vmem>>) attributes {dimension_semantics = [#tpu.dimension_semantics<parallel>], iteration_bounds = array<i64: 1>, scalar_prefetch = 0 : i64, scratch_operands = 0 : i64, tpu.core_type = #tpu.core_type<tc>, window_params = [{transform_indices = @transform_0, window_bounds = array<i64: 8, 32>}, {pipeline_mode = #tpu.pipeline_mode<synchronous>, transform_indices = @transform_1, window_bounds = array<i64: 32, 16>}, {pipeline_mode = #tpu.pipeline_mode<synchronous>, transform_indices = @transform_2, window_bounds = array<i64: 16, 128>}, {transform_indices = @transform_3, window_bounds = array<i64: 8, 128>}]} {
    %c0 = arith.constant 0 : index
    %c0_0 = arith.constant 0 : index
    %0 = vector.load %arg2[%c0, %c0_0] : memref<32x16xf32, #tpu.memory_space<vmem>>, vector<32x16xf32>
    %c0_1 = arith.constant 0 : index
    %c0_2 = arith.constant 0 : index
    %1 = vector.load %arg3[%c0_1, %c0_2] : memref<16x128xf32, #tpu.memory_space<vmem>>, vector<16x128xf32>
    %c0_3 = arith.constant 0 : index
    %c0_4 = arith.constant 0 : index
    %2 = vector.load %arg1[%c0_3, %c0_4] : memref<8x32xf32, #tpu.memory_space<vmem>>, vector<8x32xf32>
    %cst = arith.constant dense<0.000000e+00> : vector<8x16xf32>
    %3 = tpu.matmul %2, %0, %cst {dimension_numbers = #tpu.dot_dimension_numbers<[1], [0], [0], [1], [0, 0, 1, 1], [], []>} : vector<8x32xf32>, vector<32x16xf32>, vector<8x16xf32> -> vector<8x16xf32>
    %4 = tpu.iota {dimensions = array<i32: 1>} : vector<8x16xi32>
    %c0_i32 = arith.constant 0 : i32
    %5 = vector.broadcast %c0_i32 : i32 to vector<8x1xi32>
    %cst_5 = arith.constant 0.000000e+00 : f32
    %6 = vector.broadcast %cst_5 : f32 to vector<8x16xf32>
    %7 = vector.broadcast %5 : vector<8x1xi32> to vector<8x16xi32>
    %8 = arith.cmpi eq, %4, %7 : vector<8x16xi32>
    %9 = arith.extui %8 : vector<8x16xi1> to vector<8x16xi32>
    %10 = arith.sitofp %9 : vector<8x16xi32> to vector<8x16xf32>
    %11 = arith.mulf %3, %10 : vector<8x16xf32>
    %cst_6 = arith.constant dense<0.000000e+00> : vector<8xf32>
    %12 = vector.multi_reduction <add>, %11, %cst_6 [1] : vector<8x16xf32> to vector<8xf32>
    %13 = vector.shape_cast %12 : vector<8xf32> to vector<8x1xf32>
    %14 = arith.addf %6, %10 : vector<8x16xf32>
    %c2_i32 = arith.constant 2 : i32
    %15 = vector.broadcast %c2_i32 : i32 to vector<8x1xi32>
    %16 = arith.muli %5, %15 : vector<8x1xi32>
    %cst_7 = arith.constant 0.000000e+00 : f32
    %17 = vector.broadcast %cst_7 : f32 to vector<8x1xf32>
    %18 = arith.cmpf oge, %13, %17 : vector<8x1xf32>
    %19 = arith.extui %18 : vector<8x1xi1> to vector<8x1xi32>
    %20 = arith.addi %16, %19 : vector<8x1xi32>
    %c1_i32 = arith.constant 1 : i32
    %21 = vector.broadcast %c1_i32 : i32 to vector<8x1xi32>
    %22 = arith.addi %20, %21 : vector<8x1xi32>
    %23 = vector.broadcast %22 : vector<8x1xi32> to vector<8x16xi32>
    %24 = arith.cmpi eq, %4, %23 : vector<8x16xi32>
    %25 = arith.extui %24 : vector<8x16xi1> to vector<8x16xi32>
    %26 = arith.sitofp %25 : vector<8x16xi32> to vector<8x16xf32>
    %27 = arith.mulf %3, %26 : vector<8x16xf32>
    %cst_8 = arith.constant dense<0.000000e+00> : vector<8xf32>
    %28 = vector.multi_reduction <add>, %27, %cst_8 [1] : vector<8x16xf32> to vector<8xf32>
    %29 = vector.shape_cast %28 : vector<8xf32> to vector<8x1xf32>
    %30 = arith.addf %14, %26 : vector<8x16xf32>
    %c2_i32_9 = arith.constant 2 : i32
    %31 = vector.broadcast %c2_i32_9 : i32 to vector<8x1xi32>
    %32 = arith.muli %22, %31 : vector<8x1xi32>
    %cst_10 = arith.constant 0.000000e+00 : f32
    %33 = vector.broadcast %cst_10 : f32 to vector<8x1xf32>
    %34 = arith.cmpf oge, %29, %33 : vector<8x1xf32>
    %35 = arith.extui %34 : vector<8x1xi1> to vector<8x1xi32>
    %36 = arith.addi %32, %35 : vector<8x1xi32>
    %c1_i32_11 = arith.constant 1 : i32
    %37 = vector.broadcast %c1_i32_11 : i32 to vector<8x1xi32>
    %38 = arith.addi %36, %37 : vector<8x1xi32>
    %39 = vector.broadcast %38 : vector<8x1xi32> to vector<8x16xi32>
    %40 = arith.cmpi eq, %4, %39 : vector<8x16xi32>
    %41 = arith.extui %40 : vector<8x16xi1> to vector<8x16xi32>
    %42 = arith.sitofp %41 : vector<8x16xi32> to vector<8x16xf32>
    %43 = arith.mulf %3, %42 : vector<8x16xf32>
    %cst_12 = arith.constant dense<0.000000e+00> : vector<8xf32>
    %44 = vector.multi_reduction <add>, %43, %cst_12 [1] : vector<8x16xf32> to vector<8xf32>
    %45 = vector.shape_cast %44 : vector<8xf32> to vector<8x1xf32>
    %46 = arith.addf %30, %42 : vector<8x16xf32>
    %c2_i32_13 = arith.constant 2 : i32
    %47 = vector.broadcast %c2_i32_13 : i32 to vector<8x1xi32>
    %48 = arith.muli %38, %47 : vector<8x1xi32>
    %cst_14 = arith.constant 0.000000e+00 : f32
    %49 = vector.broadcast %cst_14 : f32 to vector<8x1xf32>
    %50 = arith.cmpf oge, %45, %49 : vector<8x1xf32>
    %51 = arith.extui %50 : vector<8x1xi1> to vector<8x1xi32>
    %52 = arith.addi %48, %51 : vector<8x1xi32>
    %c1_i32_15 = arith.constant 1 : i32
    %53 = vector.broadcast %c1_i32_15 : i32 to vector<8x1xi32>
    %54 = arith.addi %52, %53 : vector<8x1xi32>
    %55 = vector.broadcast %54 : vector<8x1xi32> to vector<8x16xi32>
    %56 = arith.cmpi eq, %4, %55 : vector<8x16xi32>
    %57 = arith.extui %56 : vector<8x16xi1> to vector<8x16xi32>
    %58 = arith.sitofp %57 : vector<8x16xi32> to vector<8x16xf32>
    %59 = arith.addf %46, %58 : vector<8x16xf32>
    %cst_16 = arith.constant 5.000000e-01 : f32
    %60 = vector.broadcast %cst_16 : f32 to vector<8x16xf32>
    %61 = arith.mulf %60, %3 : vector<8x16xf32>
    %cst_17 = arith.constant 0.707106769 : f32
    %62 = vector.broadcast %cst_17 : f32 to vector<8x16xf32>
    %63 = arith.mulf %3, %62 : vector<8x16xf32>
    %64 = math.erf %63 : vector<8x16xf32>
    %cst_18 = arith.constant 1.000000e+00 : f32
    %65 = vector.broadcast %cst_18 : f32 to vector<8x16xf32>
    %66 = arith.addf %65, %64 : vector<8x16xf32>
    %67 = arith.mulf %61, %66 : vector<8x16xf32>
    %68 = arith.mulf %67, %59 : vector<8x16xf32>
    %cst_19 = arith.constant dense<0.000000e+00> : vector<8x128xf32>
    %69 = tpu.matmul %68, %1, %cst_19 {dimension_numbers = #tpu.dot_dimension_numbers<[1], [0], [0], [1], [0, 0, 1, 1], [], []>} : vector<8x16xf32>, vector<16x128xf32>, vector<8x128xf32> -> vector<8x128xf32>
    %c0_20 = arith.constant 0 : index
    %c0_21 = arith.constant 0 : index
    %70 = vector.load %arg4[%c0_20, %c0_21] : memref<8x128xf32, #tpu.memory_space<vmem>>, vector<8x128xf32>
    tpu.vector_store %arg4[%c0_20, %c0_21], %69 {strides = array<i32>} : memref<8x128xf32, #tpu.memory_space<vmem>>, vector<8x128xf32>,
    return
  }
  func.func @transform_0(%arg0: i32) -> (i32, i32) {
    %c0_i32 = arith.constant 0 : i32
    %c0_i32_0 = arith.constant 0 : i32
    return %arg0, %c0_i32 : i32, i32
  }
  func.func @transform_1(%arg0: i32) -> (i32, i32) {
    %c0_i32 = arith.constant 0 : i32
    %c0_i32_0 = arith.constant 0 : i32
    %c0_i32_1 = arith.constant 0 : i32
    return %c0_i32, %c0_i32_0 : i32, i32
  }
  func.func @transform_2(%arg0: i32) -> (i32, i32) {
    %c0_i32 = arith.constant 0 : i32
    %c0_i32_0 = arith.constant 0 : i32
    %c0_i32_1 = arith.constant 0 : i32
    return %c0_i32, %c0_i32_0 : i32, i32
  }
  func.func @transform_3(%arg0: i32) -> (i32, i32) {
    %c0_i32 = arith.constant 0 : i32
    %c0_i32_0 = arith.constant 0 : i32
    return %arg0, %c0_i32 : i32, i32
  }
}

</mosaic_0001>

<llo_original>
// kernel: tpu_custom_call.1
$region0: #{tpu_custom_call.1}
  #allocation0 [shape = 'u32[]', space=smem, size = 0x4, offset = 0x4, fixed_abs, tag = 'smem constant byte address 0x4 - core index']
  #allocation1 [shape = 'u32[144,128]{1,0:T(1,128)}', space=vmem, size = 0x12000, scoped, tag = 'internal scratch']
  %s0 = inlined_call_operand.vmem [shape: f32[8,32], index: 0, kind: input, shape index: {}]
  %s1 = inlined_call_operand.vmem [shape: f32[32,16], index: 1, kind: input, shape index: {}]
  %s2 = inlined_call_operand.vmem [shape: f32[16,128], index: 2, kind: input, shape index: {}]
  %s3 = inlined_call_operand.hbm [shape: f32[8,128], index: 3, kind: output, shape index: {}]
  %s4 = sld [smem:[#allocation0]]
  $region22: #{tpu_custom_call.1} parent=0
    _
  %s6 = ssub.s32 1, %s4
  %s7 = scalar_select 0, %s6, %s4
  $region1: #{tpu_custom_call.1} parent=0
    #allocation2 [shape = 'u8[4096]{0}', space=vmem, size = 0x1000, scoped, tag = 'output window, operand 0, single buffered']
    #allocation3 [shape = 's32[1]{0}', space=sflag, size = 0x4, scoped, tag = 'scoped memory for tpu_custom_call.1']
    %8 = vsyncpa [#allocation3], 0
    // Predicated region
    $region2: #{tpu_custom_call.1} parent=1 // pred_check
      _
    $region3: #{tpu_custom_call.1} parent=1 // pred_check_branch
      %10 = sbr.rel (0) target = $region5
    $region4: #{tpu_custom_call.1} parent=1 // pred_region
      _
    $region5: #{tpu_custom_call.1} parent=1 // pred_fallthru
      _
    // Predicated region
    $region6: #{tpu_custom_call.1} parent=1 // pred_check
      _
    $region7: #{tpu_custom_call.1} parent=1 // pred_check_branch
      %12 = sbr.rel (0) target = $region9
    $region8: #{tpu_custom_call.1} parent=1 // pred_region
      _
    $region9: #{tpu_custom_call.1} parent=1 // pred_fallthru
      _
    // Predicated region
    $region10: #{tpu_custom_call.1} parent=1 // pred_check
      _
    $region11: #{tpu_custom_call.1} parent=1 // pred_check_branch
      %14 = sbr.rel (0) target = $region13
    $region12: #{tpu_custom_call.1} parent=1 // pred_region
      _
    $region13: #{tpu_custom_call.1} parent=1 // pred_fallthru
      _
    %v15 = vld [vmem:[%s1] sm:$0xff]
    %v16 = vld [vmem:[%s1 + $0x8] sm:$0xff]
    %v17 = vld [vmem:[%s1 + $0x10] sm:$0xff]
    %v18 = vld [vmem:[%s1 + $0x18] sm:$0xff]
    %v19 = vld [vmem:[%s2] sm:$0xff]
    %v20 = vld [vmem:[%s2 + $0x8] sm:$0xff]
    %v21 = vld [vmem:[%s0] sm:$0xff]
    %vm22 = vcmask 261120
    %v24 = vsel %vm22, %v21, 0
    %26 = vmatprep.subr.mxu0 0.0
    %27 = vmatpush1.msra.mxu0 0.0
    %28 = vmatprep.subr.mxu0 0.0
    %29 = vmatpush1.msra.mxu0 0.0
    %30 = vmatprep.subr.mxu0 0.0
    %31 = vmatpush1.msra.mxu0 0.0
    %32 = vmatprep.subr.mxu0 0.0
    %33 = vmatpush1.msra.mxu0 0.0
    %34 = vmatprep.subr.mxu0 0.0
    %35 = vmatpush1.msra.mxu0 0.0
    %36 = vmatprep.subr.mxu0 0.0
    %37 = vmatpush1.msra.mxu0 0.0
    %38 = vmatprep.subr.mxu0 0.0
    %39 = vmatpush1.msra.mxu0 0.0
    %40 = vmatprep.subr.mxu0 0.0
    %41 = vmatpush1.msra.mxu0 0.0
    %42 = vmatprep.subr.mxu0 0.0
    %43 = vmatpush1.msra.mxu0 0.0
    %44 = vmatprep.subr.mxu0 0.0
    %45 = vmatpush1.msra.mxu0 0.0
    %46 = vmatprep.subr.mxu0 0.0
    %47 = vmatpush1.msra.mxu0 0.0
    %48 = vmatprep.subr.mxu0 0.0
    %49 = vmatpush1.msra.mxu0 0.0
    %50 = vmatprep.subr.mxu0 0.0
    %51 = vmatpush1.msra.mxu0 %v18
    %52 = vmatprep.subr.mxu0 0.0
    %53 = vmatpush1.msra.mxu0 %v17
    %54 = vmatprep.subr.mxu0 0.0
    %55 = vmatpush1.msra.mxu0 %v16
    %56 = vmatprep.subr.mxu0 0.0
    %57 = vmatpush1.msra.mxu0 %v15
    %58 = vmatprep.subr.mxu0 0.0
    %59 = vmatpush2.msra.mxu0 0.0
    %60 = vmatprep.subr.mxu0 0.0
    %61 = vmatpush2.msra.mxu0 0.0
    %62 = vmatprep.subr.mxu0 0.0
    %63 = vmatpush2.msra.mxu0 0.0
    %64 = vmatprep.subr.mxu0 0.0
    %65 = vmatpush2.msra.mxu0 0.0
    %66 = vmatprep.subr.mxu0 0.0
    %67 = vmatpush2.msra.mxu0 0.0
    %68 = vmatprep.subr.mxu0 0.0
    %69 = vmatpush2.msra.mxu0 0.0
    %70 = vmatprep.subr.mxu0 0.0
    %71 = vmatpush2.msra.mxu0 0.0
    %72 = vmatprep.subr.mxu0 0.0
    %73 = vmatpush2.msra.mxu0 0.0
    %74 = vmatprep.subr.mxu0 0.0
    %75 = vmatpush2.msra.mxu0 0.0
    %76 = vmatprep.subr.mxu0 0.0
    %77 = vmatpush2.msra.mxu0 0.0
    %78 = vmatprep.subr.mxu0 0.0
    %79 = vmatpush2.msra.mxu0 0.0
    %80 = vmatprep.subr.mxu0 0.0
    %81 = vmatpush2.msra.mxu0 0.0
    %82 = vmatprep.subr.mxu0 0.0
    %83 = vmatpush2.msra.mxu0 0.0
    %84 = vmatprep.subr.mxu0 0.0
    %85 = vmatpush2.msra.mxu0 0.0
    %86 = vmatprep.subr.mxu0 0.0
    %87 = vmatpush2.msra.mxu0 0.0
    %88 = vmatprep.subr.mxu0 0.0
    %89 = vmatpush2.msra.mxu0 0.0
    %90 = vmatprep.mubr.f32.mxu0 0.0
    %91 = vmatmul.mubr.f32.gmra.mxu0 %v24
    %v92 = vpop.f32.mrf.mxu0
    %v93 = vadd.f32 0.0, %v92
    %v94 = vpop.f32.mrf.mxu0
    %95 = vdwg.mxu0
    %v96 = vlaneseq
    %v97 = vand.u32 %v96, 127
    %vm98 = vcmp.eq.s32.totalorder %v97, 0
    %v99 = vsel %vm98, 1, 0
    %v100 = vcvt.s32.f32 %v99
    %v101 = vmul.f32 %v93, %v100
    %vm102 = vcmask 130048
    %v103 = vsel %vm102, %v101, 0.0
    %104 = vadd.xlane.f32.xlu0 %v103
    %v105 = vpop.xlane.xlu0 %104
    %v106 = vadd.f32 %v100, 0.0
    %vm107 = vcmp.ge.f32.partialorder %v105, 0.0
    %v108 = vsel %vm107, 1, 0
    %v109 = vadd.s32 %v108, 1
    %vm110 = vcmp.eq.s32.totalorder %v97, %v109
    %v111 = vsel %vm110, 1, 0
    %v112 = vcvt.s32.f32 %v111
    %v113 = vmul.f32 %v93, %v112
    %v114 = vsel %vm102, %v113, 0.0
    %115 = vadd.xlane.f32.xlu0 %v114
    %v116 = vpop.xlane.xlu0 %115
    %v117 = vadd.f32 %v106, %v112
    %v118 = vmul.u32 %v109, 2
    %vm119 = vcmp.ge.f32.partialorder %v116, 0.0
    %v120 = vsel %vm119, 1, 0
    %v121 = vadd.s32 %v118, %v120
    %v122 = vadd.s32 %v121, 1
    %vm123 = vcmp.eq.s32.totalorder %v97, %v122
    %v124 = vsel %vm123, 1, 0
    %v125 = vcvt.s32.f32 %v124
    %v126 = vmul.f32 %v93, %v125
    %v127 = vsel %vm102, %v126, 0.0
    %128 = vadd.xlane.f32.xlu0 %v127
    %v129 = vpop.xlane.xlu0 %128
    %v130 = vadd.f32 %v117, %v125
    %v131 = vmul.u32 %v122, 2
    %vm132 = vcmp.ge.f32.partialorder %v129, 0.0
    %v133 = vsel %vm132, 1, 0
    %v134 = vadd.s32 %v131, %v133
    %v135 = vadd.s32 %v134, 1
    %vm136 = vcmp.eq.s32.totalorder %v97, %v135
    %v137 = vsel %vm136, 1, 0
    %v138 = vcvt.s32.f32 %v137
    %v139 = vadd.f32 %v130, %v138
    %v140 = vmul.f32 %v93, 0.5
    %v141 = vmul.f32 %v93, 0.70710677
    %v142 = verf.f32.pop %v141
    %v143 = vadd.f32 %v142, 1.0
    %v144 = vmul.f32 %v140, %v143
    %v145 = vmul.f32 %v144, %v139
    %v147 = vsel %vm102, %v145, 0
    %149 = vmatprep.subr.mxu0 0.0
    %150 = vmatpush1.msra.mxu0 0.0
    %151 = vmatprep.subr.mxu0 0.0
    %152 = vmatpush1.msra.mxu0 0.0
    %153 = vmatprep.subr.mxu0 0.0
    %154 = vmatpush1.msra.mxu0 0.0
    %155 = vmatprep.subr.mxu0 0.0
    %156 = vmatpush1.msra.mxu0 0.0
    %157 = vmatprep.subr.mxu0 0.0
    %158 = vmatpush1.msra.mxu0 0.0
    %159 = vmatprep.subr.mxu0 0.0
    %160 = vmatpush1.msra.mxu0 0.0
    %161 = vmatprep.subr.mxu0 0.0
    %162 = vmatpush1.msra.mxu0 0.0
    %163 = vmatprep.subr.mxu0 0.0
    %164 = vmatpush1.msra.mxu0 0.0
    %165 = vmatprep.subr.mxu0 0.0
    %166 = vmatpush1.msra.mxu0 0.0
    %167 = vmatprep.subr.mxu0 0.0
    %168 = vmatpush1.msra.mxu0 0.0
    %169 = vmatprep.subr.mxu0 0.0
    %170 = vmatpush1.msra.mxu0 0.0
    %171 = vmatprep.subr.mxu0 0.0
    %172 = vmatpush1.msra.mxu0 0.0
    %173 = vmatprep.subr.mxu0 0.0
    %174 = vmatpush1.msra.mxu0 0.0
    %175 = vmatprep.subr.mxu0 0.0
    %176 = vmatpush1.msra.mxu0 0.0
    %177 = vmatprep.subr.mxu0 0.0
    %178 = vmatpush1.msra.mxu0 %v20
    %179 = vmatprep.subr.mxu0 0.0
    %180 = vmatpush1.msra.mxu0 %v19
    %181 = vmatprep.subr.mxu0 0.0
    %182 = vmatpush2.msra.mxu0 0.0
    %183 = vmatprep.subr.mxu0 0.0
    %184 = vmatpush2.msra.mxu0 0.0
    %185 = vmatprep.subr.mxu0 0.0
    %186 = vmatpush2.msra.mxu0 0.0
    %187 = vmatprep.subr.mxu0 0.0
    %188 = vmatpush2.msra.mxu0 0.0
    %189 = vmatprep.subr.mxu0 0.0
    %190 = vmatpush2.msra.mxu0 0.0
    %191 = vmatprep.subr.mxu0 0.0
    %192 = vmatpush2.msra.mxu0 0.0
    %193 = vmatprep.subr.mxu0 0.0
    %194 = vmatpush2.msra.mxu0 0.0
    %195 = vmatprep.subr.mxu0 0.0
    %196 = vmatpush2.msra.mxu0 0.0
    %197 = vmatprep.subr.mxu0 0.0
    %198 = vmatpush2.msra.mxu0 0.0
    %199 = vmatprep.subr.mxu0 0.0
    %200 = vmatpush2.msra.mxu0 0.0
    %201 = vmatprep.subr.mxu0 0.0
    %202 = vmatpush2.msra.mxu0 0.0
    %203 = vmatprep.subr.mxu0 0.0
    %204 = vmatpush2.msra.mxu0 0.0
    %205 = vmatprep.subr.mxu0 0.0
    %206 = vmatpush2.msra.mxu0 0.0
    %207 = vmatprep.subr.mxu0 0.0
    %208 = vmatpush2.msra.mxu0 0.0
    %209 = vmatprep.subr.mxu0 0.0
    %210 = vmatpush2.msra.mxu0 0.0
    %211 = vmatprep.subr.mxu0 0.0
    %212 = vmatpush2.msra.mxu0 0.0
    %213 = vmatprep.mubr.f32.mxu0 0.0
    %214 = vmatmul.mubr.f32.gmra.mxu0 %v147
    %v215 = vpop.f32.mrf.mxu0
    %v216 = vadd.f32 0.0, %v215
    %v217 = vpop.f32.mrf.mxu0
    %218 = vdwg.mxu0
    %219 = vst [vmem:[#allocation2] sm:$0xff] %v216
    // Predicated region
    $region14: #{tpu_custom_call.1} parent=1 // pred_check
      _
    $region15: #{tpu_custom_call.1} parent=1 // pred_check_branch
      %221 = sbr.rel (0) target = $region17
    $region16: #{tpu_custom_call.1} parent=1 // pred_region
      %s223 = ssub.s32 128, 128
      %224 = vsyncadd [#allocation3], %s223
      %s226 = sshll.u32 [#allocation2], 4
      %s227 = int_to_ptr.vmem [resolvable:$true] %s226
      %229 = dma.vmem_to_hbm [thread:$0]  %s227, 128, %s3, [#allocation3]
    $region17: #{tpu_custom_call.1} parent=1 // pred_fallthru
      _
    // Predicated region
    $region18: #{tpu_custom_call.1} parent=1 // pred_check
      _
    $region19: #{tpu_custom_call.1} parent=1 // pred_check_branch
      %231 = sbr.rel (0) target = $region21
    $region20: #{tpu_custom_call.1} parent=1 // pred_region
      %232 = dma.done [#allocation3], 128
    $region21: #{tpu_custom_call.1} parent=1 // pred_fallthru
      _
    %233 = vsyncpa [#allocation3], 1

</llo_original>
